<compile_context>
chip_gen: v5e
topology: v5e:2x2
jax: 0.10.0
libtpu: 0.0.40
codegen_flags: <defaults>
</compile_context>

<pallas_src>
import jax
import jax.numpy as jnp
from jax.experimental import pallas as pl
from jax.experimental.pallas import tpu as pltpu

_LANE = 128


def _round_up(n: int, m: int) -> int:
    return ((n + m - 1) // m) * m


def _cdiv(a: int, b: int) -> int:
    return (a + b - 1) // b


def _sublane(dtype) -> int:
    # Packed vreg sublane count: (8,128) f32, (16,128) bf16, (32,128) int8/fp8.
    return max(8, 32 // jnp.dtype(dtype).itemsize)


def _vmem_capacity_bytes() -> int:
    try:
        cap = int(pltpu.get_tpu_info().vmem_capacity_bytes)
        if cap > 0:
            return cap
    except Exception:
        pass
    return 64 * 1024 * 1024  # conservative fallback (v7x per-TC physical VMEM)


def f1_kernel(x_ref, w0_ref, b0_ref, w1_ref, b1_ref, o_ref):
    # Hidden layer: MXU matmul with f32 accumulation, fused bias + ReLU (VPU).
    h = jnp.dot(x_ref[...], w0_ref[...], preferred_element_type=jnp.float32)
    h = jnp.maximum(h + b0_ref[...].astype(jnp.float32), 0.0)
    # Second matmul: feed operands in the weight dtype (bf16 on the bf16 path),
    # accumulate in f32, fuse the output bias.
    out = jnp.dot(h.astype(w1_ref.dtype), w1_ref[...],
                  preferred_element_type=jnp.float32)
    out = out + b1_ref[...].astype(jnp.float32)
    o_ref[...] = out.astype(o_ref.dtype)


class F1Pallas:
    """Pallas F1: relu(x @ w0 + b0) @ w1 + b1.

    Weights/biases are padded once at construction and kept resident in VMEM
    across batch tiles; activations are streamed over a batch grid.
    """

    def __init__(self, w0, b0, w1, b1, *, compute_dtype=jnp.float32):
        self.compute_dtype = jnp.dtype(compute_dtype)
        self.in_dim = int(w0.shape[0])
        self.hidden = int(w0.shape[1])
        self.out_dim = int(w1.shape[1])

        # Padding policy:
        #   K (in_dim): never padded -> streamed x keeps its logical width.
        #   H (hidden): padded to a lane multiple once (cached; lane-dense MXU).
        #   N (out_dim): padded only when >= 128; for small out_dim the extra
        #                write traffic costs more than masked stores.
        self.K = self.in_dim
        self.H = _round_up(self.hidden, _LANE)
        self.N = (_round_up(self.out_dim, _LANE)
                  if self.out_dim >= _LANE else self.out_dim)

        cd = self.compute_dtype

        def pad2(a, shape):
            a = jnp.asarray(a)
            if tuple(a.shape) == shape and a.dtype == cd:
                return a
            buf = jnp.zeros(shape, cd)
            return buf.at[: a.shape[0], : a.shape[1]].set(a.astype(cd))

        # Hoisted, one-time parameter padding (no per-call HBM copies).
        self.w0p = pad2(w0, (self.K, self.H))
        self.w1p = pad2(w1, (self.H, self.N))
        self.b0p = jnp.zeros((1, self.H), jnp.float32).at[0, : self.hidden].set(
            jnp.asarray(b0, jnp.float32))
        self.b1p = jnp.zeros((1, self.N), jnp.float32).at[0, : self.out_dim].set(
            jnp.asarray(b1, jnp.float32))

    def __call__(self, x, *, out_dtype=None):
        cd = self.compute_dtype
        out_dtype = cd if out_dtype is None else jnp.dtype(out_dtype)

        lead = x.shape[:-1]
        assert x.shape[-1] == self.in_dim, "trailing dim must equal in_dim"
        x2 = x.reshape(-1, self.in_dim).astype(cd)
        batch = x2.shape[0]

        sub = _sublane(cd)
        itm = cd.itemsize
        oitm = out_dtype.itemsize
        K, H, N = self.K, self.H, self.N

        # ---------------- generation-aware VMEM budget -----------------------
        capacity = _vmem_capacity_bytes()
        budget = int(capacity * 0.7)  # ~90 MiB on v5e/v6e, ~45 MiB on v7x

        # Pallas double-buffers every input block (even the resident weights).
        weight_bytes = 2 * ((K * H + H * N) * itm + (H + N) * 4)

        def tile_bytes(tm):
            # 2x streamed x tile + 2x out tile + f32 hidden intermediate.
            return 2 * tm * K * itm + 2 * tm * N * oitm + tm * H * 4

        tm_fit = sub
        for cand in (2048, 1024, 512, 256, 128, 64, 32, 16, 8):
            if cand < sub or cand % sub:
                continue
            if weight_bytes + tile_bytes(cand) <= budget:
                tm_fit = cand
                break

        # ---------------- batch tiling ---------------------------------------
        batch_al = _round_up(batch, sub)
        n_tiles = _cdiv(batch_al, tm_fit)
        if n_tiles == 1 and batch_al >= 2 * sub:
            # Keep both v7x TensorCores busy (batch axis is "parallel");
            # harmless (~0.35us/step) on v5e/v6e.
            n_tiles = 2
        # Rebalance the tile size so B ~= batch (minimal padded rows).
        tm = _round_up(_cdiv(batch_al, n_tiles), sub)
        n_tiles = _cdiv(batch_al, tm)
        B = tm * n_tiles

        # Only the activation pad runs per call (batch rows only, K untouched).
        xp = x2 if B == batch else jnp.zeros((B, K), cd).at[:batch].set(x2)

        vmem_limit = weight_bytes + tile_bytes(tm) + (4 << 20)  # compiler headroom
        vmem_limit = max(vmem_limit, 16 << 20)
        vmem_limit = min(vmem_limit, capacity, 100 << 20)

        cost = pl.CostEstimate(
            flops=2 * B * (K * H + H * N),
            transcendentals=0,
            bytes_accessed=((B * K + K * H + H * N) * itm
                            + (H + N) * 4 + B * N * oitm),
        )

        out_padded = pl.pallas_call(
            f1_kernel,
            out_shape=jax.ShapeDtypeStruct((B, N), out_dtype),
            grid=(n_tiles,),
            in_specs=[
                pl.BlockSpec((tm, K), lambda i: (i, 0)),  # activations: streamed
                pl.BlockSpec((K, H), lambda i: (0, 0)),   # w0: resident in VMEM
                pl.BlockSpec((1, H), lambda i: (0, 0)),   # b0: resident
                pl.BlockSpec((H, N), lambda i: (0, 0)),   # w1: resident
                pl.BlockSpec((1, N), lambda i: (0, 0)),   # b1: resident
            ],
            out_specs=pl.BlockSpec((tm, N), lambda i: (i, 0)),
            compiler_params=pltpu.CompilerParams(
                dimension_semantics=("parallel",),
                vmem_limit_bytes=int(vmem_limit),
            ),
            cost_estimate=cost,
        )(xp, self.w0p, self.b0p, self.w1p, self.b1p)

        out = out_padded[:batch, : self.out_dim]
        return out.reshape(*lead, self.out_dim)


def f1_forward(x, w0, b0, w1, b1, *, compute_dtype=None, out_dtype=None):
    """Convenience one-shot wrapper (pads weights on every call; prefer F1Pallas)."""
    if compute_dtype is None:
        compute_dtype = x.dtype
    return F1Pallas(w0, b0, w1, b1, compute_dtype=compute_dtype)(
        x, out_dtype=out_dtype)


def f1_reference(x, w0, b0, w1, b1):
    # Pure-JAX reference of the PyTorch forward pass (f32 throughout).
    temp = jnp.maximum(jnp.matmul(x, w0) + b0, 0.0)
    return jnp.matmul(temp, w1) + b1


if __name__ == "__main__":
    key = jax.random.PRNGKey(0)
    k_x, k_w0, k_b0, k_w1, k_b1 = jax.random.split(key, 5)

    # Small shapes consistent with the module: batch=8, in=32, hidden=64, out=16.
    batch, in_dim, hidden, out_dim = 8, 32, 64, 16

    x = jax.random.normal(k_x, (batch, in_dim), dtype=jnp.float32)
    w0 = jax.random.normal(k_w0, (in_dim, hidden), dtype=jnp.float32) * 0.1
    b0 = jax.random.normal(k_b0, (hidden,), dtype=jnp.float32) * 0.1
    w1 = jax.random.normal(k_w1, (hidden, out_dim), dtype=jnp.float32) * 0.1
    b1 = jax.random.normal(k_b1, (out_dim,), dtype=jnp.float32) * 0.1

    ref = f1_reference(x, w0, b0, w1, b1)

    # Full-precision path: f32 MXU inputs, f32 accumulation, padding hoisted.
    mlp_f32 = F1Pallas(w0, b0, w1, b1, compute_dtype=jnp.float32)
    out_f32 = jax.block_until_ready(mlp_f32(x))
    assert out_f32.shape == (batch, out_dim)
    assert jnp.allclose(out_f32, ref, atol=1e-5, rtol=1e-5), "f32 mismatch vs reference"

    # bf16 MXU fast path (all generations): bf16 operands, f32 accumulation,
    # bf16 output (halves write traffic).
    mlp_bf16 = F1Pallas(w0, b0, w1, b1, compute_dtype=jnp.bfloat16)
    out_bf16 = jax.block_until_ready(mlp_bf16(x))
    assert out_bf16.shape == (batch, out_dim)
    assert jnp.allclose(out_bf16.astype(jnp.float32), ref,
                        atol=5e-2, rtol=5e-2), "bf16 mismatch vs reference"

    print("KERNEL_OK")
</pallas_src>

<mosaic_0001>
module attributes {stable_mosaic.version = 11 : i64} {
  func.func @f1_kernel(%arg0: i32, %arg1: memref<8x32xf32, #tpu.memory_space<vmem>>, %arg2: memref<32x128xf32, #tpu.memory_space<vmem>>, %arg3: memref<1x128xf32, #tpu.memory_space<vmem>>, %arg4: memref<128x16xf32, #tpu.memory_space<vmem>>, %arg5: memref<1x16xf32, #tpu.memory_space<vmem>>, %arg6: memref<8x16xf32, #tpu.memory_space<vmem>>) attributes {dimension_semantics = [#tpu.dimension_semantics<parallel>], iteration_bounds = array<i64: 1>, scalar_prefetch = 0 : i64, scratch_operands = 0 : i64, tpu.core_type = #tpu.core_type<tc>, window_params = [{transform_indices = @transform_0, window_bounds = array<i64: 8, 32>}, {pipeline_mode = #tpu.pipeline_mode<synchronous>, transform_indices = @transform_1, window_bounds = array<i64: 32, 128>}, {pipeline_mode = #tpu.pipeline_mode<synchronous>, transform_indices = @transform_2, window_bounds = array<i64: 1, 128>}, {pipeline_mode = #tpu.pipeline_mode<synchronous>, transform_indices = @transform_3, window_bounds = array<i64: 128, 16>}, {pipeline_mode = #tpu.pipeline_mode<synchronous>, transform_indices = @transform_4, window_bounds = array<i64: 1, 16>}, {transform_indices = @transform_5, window_bounds = array<i64: 8, 16>}]} {
    %c0 = arith.constant 0 : index
    %c0_0 = arith.constant 0 : index
    %0 = vector.load %arg1[%c0, %c0_0] : memref<8x32xf32, #tpu.memory_space<vmem>>, vector<8x32xf32>
    %c0_1 = arith.constant 0 : index
    %c0_2 = arith.constant 0 : index
    %1 = vector.load %arg2[%c0_1, %c0_2] : memref<32x128xf32, #tpu.memory_space<vmem>>, vector<32x128xf32>
    %cst = arith.constant dense<0.000000e+00> : vector<8x128xf32>
    %2 = tpu.matmul %0, %1, %cst {dimension_numbers = #tpu.dot_dimension_numbers<[1], [0], [0], [1], [0, 0, 1, 1], [], []>} : vector<8x32xf32>, vector<32x128xf32>, vector<8x128xf32> -> vector<8x128xf32>
    %c0_3 = arith.constant 0 : index
    %c0_4 = arith.constant 0 : index
    %3 = vector.load %arg3[%c0_3, %c0_4] : memref<1x128xf32, #tpu.memory_space<vmem>>, vector<1x128xf32>
    %4 = vector.broadcast %3 : vector<1x128xf32> to vector<8x128xf32>
    %5 = arith.addf %2, %4 : vector<8x128xf32>
    %cst_5 = arith.constant 0.000000e+00 : f32
    %6 = vector.broadcast %cst_5 : f32 to vector<8x128xf32>
    %7 = arith.maximumf %5, %6 : vector<8x128xf32>
    %c0_6 = arith.constant 0 : index
    %c0_7 = arith.constant 0 : index
    %8 = vector.load %arg4[%c0_6, %c0_7] : memref<128x16xf32, #tpu.memory_space<vmem>>, vector<128x16xf32>
    %cst_8 = arith.constant dense<0.000000e+00> : vector<8x16xf32>
    %9 = tpu.matmul %7, %8, %cst_8 {dimension_numbers = #tpu.dot_dimension_numbers<[1], [0], [0], [1], [0, 0, 1, 1], [], []>} : vector<8x128xf32>, vector<128x16xf32>, vector<8x16xf32> -> vector<8x16xf32>
    %c0_9 = arith.constant 0 : index
    %c0_10 = arith.constant 0 : index
    %10 = vector.load %arg5[%c0_9, %c0_10] : memref<1x16xf32, #tpu.memory_space<vmem>>, vector<1x16xf32>
    %11 = vector.broadcast %10 : vector<1x16xf32> to vector<8x16xf32>
    %12 = arith.addf %9, %11 : vector<8x16xf32>
    %c0_11 = arith.constant 0 : index
    %c0_12 = arith.constant 0 : index
    %13 = vector.load %arg6[%c0_11, %c0_12] : memref<8x16xf32, #tpu.memory_space<vmem>>, vector<8x16xf32>
    tpu.vector_store %arg6[%c0_11, %c0_12], %12 {strides = array<i32>} : memref<8x16xf32, #tpu.memory_space<vmem>>, vector<8x16xf32>,
    return
  }
  func.func @transform_0(%arg0: i32) -> (i32, i32) {
    %c0_i32 = arith.constant 0 : i32
    %c0_i32_0 = arith.constant 0 : i32
    return %arg0, %c0_i32 : i32, i32
  }
  func.func @transform_1(%arg0: i32) -> (i32, i32) {
    %c0_i32 = arith.constant 0 : i32
    %c0_i32_0 = arith.constant 0 : i32
    %c0_i32_1 = arith.constant 0 : i32
    return %c0_i32, %c0_i32_0 : i32, i32
  }
  func.func @transform_2(%arg0: i32) -> (i32, i32) {
    %c0_i32 = arith.constant 0 : i32
    %c0_i32_0 = arith.constant 0 : i32
    %c0_i32_1 = arith.constant 0 : i32
    return %c0_i32, %c0_i32_0 : i32, i32
  }
  func.func @transform_3(%arg0: i32) -> (i32, i32) {
    %c0_i32 = arith.constant 0 : i32
    %c0_i32_0 = arith.constant 0 : i32
    %c0_i32_1 = arith.constant 0 : i32
    return %c0_i32, %c0_i32_0 : i32, i32
  }
  func.func @transform_4(%arg0: i32) -> (i32, i32) {
    %c0_i32 = arith.constant 0 : i32
    %c0_i32_0 = arith.constant 0 : i32
    %c0_i32_1 = arith.constant 0 : i32
    return %c0_i32, %c0_i32_0 : i32, i32
  }
  func.func @transform_5(%arg0: i32) -> (i32, i32) {
    %c0_i32 = arith.constant 0 : i32
    %c0_i32_0 = arith.constant 0 : i32
    return %arg0, %c0_i32 : i32, i32
  }
}

</mosaic_0001>

<llo_original>
// kernel: tpu_custom_call.1
$region0: #{tpu_custom_call.1}
  #allocation0 [shape = 'u32[]', space=smem, size = 0x4, offset = 0x4, fixed_abs, tag = 'smem constant byte address 0x4 - core index']
  #allocation1 [shape = 'u32[72,128]{1,0:T(1,128)}', space=vmem, size = 0x9000, scoped, tag = 'internal scratch']
  %s0 = inlined_call_operand.vmem [shape: f32[8,32], index: 0, kind: input, shape index: {}]
  %s1 = inlined_call_operand.vmem [shape: f32[32,128], index: 1, kind: input, shape index: {}]
  %s2 = inlined_call_operand.vmem [shape: f32[1,128], index: 2, kind: input, shape index: {}]
  %s3 = inlined_call_operand.vmem [shape: f32[128,16], index: 3, kind: input, shape index: {}]
  %s4 = inlined_call_operand.vmem [shape: f32[1,16], index: 4, kind: input, shape index: {}]
  %s5 = inlined_call_operand.hbm [shape: f32[8,16], index: 5, kind: output, shape index: {}]
  %s6 = sld [smem:[#allocation0]]
  $region30: #{tpu_custom_call.1} parent=0
    _
  %s8 = ssub.s32 1, %s6
  %s9 = scalar_select 0, %s8, %s6
  $region1: #{tpu_custom_call.1} parent=0
    #allocation2 [shape = 'u8[4096]{0}', space=vmem, size = 0x1000, scoped, tag = 'output window, operand 0, single buffered']
    #allocation3 [shape = 's32[1]{0}', space=sflag, size = 0x4, scoped, tag = 'scoped memory for tpu_custom_call.1']
    %10 = vsyncpa [#allocation3], 0
    // Predicated region
    $region2: #{tpu_custom_call.1} parent=1 // pred_check
      _
    $region3: #{tpu_custom_call.1} parent=1 // pred_check_branch
      %12 = sbr.rel (0) target = $region5
    $region4: #{tpu_custom_call.1} parent=1 // pred_region
      _
    $region5: #{tpu_custom_call.1} parent=1 // pred_fallthru
      _
    // Predicated region
    $region6: #{tpu_custom_call.1} parent=1 // pred_check
      _
    $region7: #{tpu_custom_call.1} parent=1 // pred_check_branch
      %14 = sbr.rel (0) target = $region9
    $region8: #{tpu_custom_call.1} parent=1 // pred_region
      _
    $region9: #{tpu_custom_call.1} parent=1 // pred_fallthru
      _
    // Predicated region
    $region10: #{tpu_custom_call.1} parent=1 // pred_check
      _
    $region11: #{tpu_custom_call.1} parent=1 // pred_check_branch
      %16 = sbr.rel (0) target = $region13
    $region12: #{tpu_custom_call.1} parent=1 // pred_region
      _
    $region13: #{tpu_custom_call.1} parent=1 // pred_fallthru
      _
    // Predicated region
    $region14: #{tpu_custom_call.1} parent=1 // pred_check
      _
    $region15: #{tpu_custom_call.1} parent=1 // pred_check_branch
      %18 = sbr.rel (0) target = $region17
    $region16: #{tpu_custom_call.1} parent=1 // pred_region
      _
    $region17: #{tpu_custom_call.1} parent=1 // pred_fallthru
      _
    // Predicated region
    $region18: #{tpu_custom_call.1} parent=1 // pred_check
      _
    $region19: #{tpu_custom_call.1} parent=1 // pred_check_branch
      %20 = sbr.rel (0) target = $region21
    $region20: #{tpu_custom_call.1} parent=1 // pred_region
      _
    $region21: #{tpu_custom_call.1} parent=1 // pred_fallthru
      _
    %v21 = vld [vmem:[%s0] sm:$0xff]
    %v22 = vld [vmem:[%s1] sm:$0xff]
    %v23 = vld [vmem:[%s1 + $0x8] sm:$0xff]
    %v24 = vld [vmem:[%s1 + $0x10] sm:$0xff]
    %v25 = vld [vmem:[%s1 + $0x18] sm:$0xff]
    %v26 = vld [vmem:[%s2] sm:$0x1]
    %v28 = vperm.slane %v26, 0
    %vm30 = vcmask 261120
    %v32 = vsel %vm30, %v21, 0
    %34 = vmatpush.msra.mxu0 0.0
    %35 = vmatpush.msra.mxu0 0.0
    %36 = vmatpush.msra.mxu0 0.0
    %37 = vmatpush.msra.mxu0 0.0
    %38 = vmatpush.msra.mxu0 0.0
    %39 = vmatpush.msra.mxu0 0.0
    %40 = vmatpush.msra.mxu0 0.0
    %41 = vmatpush.msra.mxu0 0.0
    %42 = vmatpush.msra.mxu0 0.0
    %43 = vmatpush.msra.mxu0 0.0
    %44 = vmatpush.msra.mxu0 0.0
    %45 = vmatpush.msra.mxu0 0.0
    %46 = vmatpush.msra.mxu0 %v25
    %47 = vmatpush.msra.mxu0 %v24
    %48 = vmatpush.msra.mxu0 %v23
    %49 = vmatpush.msra.mxu0 %v22
    %50 = vmatmul.f32.gmra.mxu0 %v32
    %v51 = vpop.f32.mrf.mxu0
    %v52 = vadd.f32 %v28, %v51
    %53 = vdwg.mxu0
    %v54 = vmax.f32 %v52, 0.0
    %v55 = vld [vmem:[%s3] sm:$0xff]
    %v56 = vld [vmem:[%s3 + $0x8] sm:$0xff]
    %v57 = vld [vmem:[%s3 + $0x10] sm:$0xff]
    %v58 = vld [vmem:[%s3 + $0x18] sm:$0xff]
    %v59 = vld [vmem:[%s3 + $0x20] sm:$0xff]
    %v60 = vld [vmem:[%s3 + $0x28] sm:$0xff]
    %v61 = vld [vmem:[%s3 + $0x30] sm:$0xff]
    %v62 = vld [vmem:[%s3 + $0x38] sm:$0xff]
    %v63 = vld [vmem:[%s3 + $0x40] sm:$0xff]
    %v64 = vld [vmem:[%s3 + $0x48] sm:$0xff]
    %v65 = vld [vmem:[%s3 + $0x50] sm:$0xff]
    %v66 = vld [vmem:[%s3 + $0x58] sm:$0xff]
    %v67 = vld [vmem:[%s3 + $0x60] sm:$0xff]
    %v68 = vld [vmem:[%s3 + $0x68] sm:$0xff]
    %v69 = vld [vmem:[%s3 + $0x70] sm:$0xff]
    %v70 = vld [vmem:[%s3 + $0x78] sm:$0xff]
    %v71 = vld [vmem:[%s4] sm:$0x1]
    %v73 = vperm.slane %v71, 0
    %75 = vmatpush.msra.mxu0 %v70
    %76 = vmatpush.msra.mxu0 %v69
    %77 = vmatpush.msra.mxu0 %v68
    %78 = vmatpush.msra.mxu0 %v67
    %79 = vmatpush.msra.mxu0 %v66
    %80 = vmatpush.msra.mxu0 %v65
    %81 = vmatpush.msra.mxu0 %v64
    %82 = vmatpush.msra.mxu0 %v63
    %83 = vmatpush.msra.mxu0 %v62
    %84 = vmatpush.msra.mxu0 %v61
    %85 = vmatpush.msra.mxu0 %v60
    %86 = vmatpush.msra.mxu0 %v59
    %87 = vmatpush.msra.mxu0 %v58
    %88 = vmatpush.msra.mxu0 %v57
    %89 = vmatpush.msra.mxu0 %v56
    %90 = vmatpush.msra.mxu0 %v55
    %91 = vmatmul.f32.gmra.mxu0 %v54
    %v92 = vpop.f32.mrf.mxu0
    %v93 = vadd.f32 %v73, %v92
    %94 = vdwg.mxu0
    %vm95 = vcmask 130048
    %96 = vst.msk [vmem:[#allocation2] sm:$0xff] %vm95, %v93
    // Predicated region
    $region22: #{tpu_custom_call.1} parent=1 // pred_check
      _
    $region23: #{tpu_custom_call.1} parent=1 // pred_check_branch
      %98 = sbr.rel (0) target = $region25
    $region24: #{tpu_custom_call.1} parent=1 // pred_region
      %100 = vsyncadd [#allocation3], 0
      %s102 = sshll.u32 [#allocation2], 4
      %s103 = int_to_ptr.vmem [resolvable:$true] %s102
      %s104 = sshll.u32 %s5, 4
      %s105 = int_to_ptr.hbm [resolvable:$true] %s104
      %107 = dma.vmem_to_hbm [thread:$0]  %s103, 128, %s105, [#allocation3]
    $region25: #{tpu_custom_call.1} parent=1 // pred_fallthru
      _
    // Predicated region
    $region26: #{tpu_custom_call.1} parent=1 // pred_check
      _
    $region27: #{tpu_custom_call.1} parent=1 // pred_check_branch
      %109 = sbr.rel (0) target = $region29
    $region28: #{tpu_custom_call.1} parent=1 // pred_region
      %111 = dma.done [#allocation3], 128
    $region29: #{tpu_custom_call.1} parent=1 // pred_fallthru
      _
    %112 = vsyncpa [#allocation3], 1

</llo_original>
